<compile_context>
chip_gen: v5e
topology: v5e:2x2
jax: 0.10.0
libtpu: 0.0.40
codegen_flags: <defaults>
</compile_context>

<pallas_src>
import jax
import jax.numpy as jnp
from jax.experimental import pallas as pl
from jax.experimental.pallas import tpu as pltpu


_LANE = 128     # lane (last-dim) tile granularity for unmasked vector stores
_MAX_TC = 256   # channel-tile cap (full C below this; sublane-aligned above)


def _choose_tiles(C, HW, dtype_bytes, block_bytes):
    """Pick (channel_tile, spatial_tile) for one (C, HW) x-block."""
    tc = C if C <= _MAX_TC else _MAX_TC
    if HW <= _LANE:
        thw = HW                               # full-extent last dim is legal
    else:
        hw_floor = (HW // _LANE) * _LANE       # >= 128
        target = block_bytes // max(1, tc * dtype_bytes)
        target = max(_LANE, (target // _LANE) * _LANE)
        thw = min(target, hw_floor)            # multiple of 128, <= HW
    return tc, thw


def _default_block_bytes():
    """Per-block VMEM budget for the x/out streams, scaled by chip generation."""
    try:
        kind = jax.devices()[0].device_kind.lower()
    except Exception:
        return 2 << 20
    if any(v in kind for v in ("v2", "v3", "v4", "v5")):
        return 2 << 20   # v5e: ~5 us/step at 820 GB/s, bigger tiles buy <5%
    if any(v in kind for v in ("v6", "v7", "trillium")):
        return 4 << 20   # v6e/v7x: amortize the ~0.35 us fixed per-step cost
    return 2 << 20       # unknown backend (e.g. interpret): conservative


def _noise_add_kernel(w_ref, x_ref, n_ref, o_ref):
    # w_ref: (TC, 1)   per-channel weight (original dtype; cast on the VPU)
    # x_ref: (TC, THW) one tile of x
    # n_ref: (1, THW)  one tile of noise (shared across channels)
    # o_ref: (TC, THW)
    w = w_ref[...].astype(o_ref.dtype)
    n = n_ref[...].astype(o_ref.dtype)
    o_ref[...] = x_ref[...] + w * n


def noise_layer(x_nchw, weight, noise=None, *, seed=0, block_bytes=None):
    """Pallas NoiseLayer.forward: x + weight.view(1, C, 1, 1) * noise.

    x_nchw : (N, C, H, W)
    weight : (C,)                    (kept in its own dtype; cast in-kernel)
    noise  : optional (N, 1, H, W).  If None, per-pixel N(0, 1) noise is drawn
             with jax.random (deterministic for a given `seed`).
    block_bytes : per-block VMEM budget for the x/out streams; None = per-chip
             default (2 MiB on v5e, 4 MiB on v6e/v7x).
    """
    N, C, H, W = x_nchw.shape
    HW = H * W
    dtype = x_nchw.dtype
    dtype_bytes = jnp.dtype(dtype).itemsize

    if noise is None:
        # TODO(synk): in-kernel noise generation via pltpu.prng_seed /
        # stateful_normal would remove this tensor's HBM round-trip, but those
        # primitives have no interpret/CPU lowering; generate in the wrapper.
        noise = jax.random.normal(
            jax.random.PRNGKey(seed), (N, 1, H, W), dtype=dtype
        )

    if block_bytes is None:
        block_bytes = _default_block_bytes()

    tc, thw = _choose_tiles(C, HW, dtype_bytes, block_bytes)
    # Channel tile innermost: the noise block index (b, 0, s) stays constant
    # across consecutive channel tiles, so it is not re-DMA'd when C > _MAX_TC.
    grid = (N, pl.cdiv(HW, thw), pl.cdiv(C, tc))

    x_flat = x_nchw.reshape(N, C, HW)      # metadata-only reshape, no copy
    n_flat = noise.reshape(N, 1, HW)       # original dtype; cast in-kernel
    w_2d = weight.reshape(C, 1)            # original dtype; cast in-kernel

    x_spec = pl.BlockSpec((pl.Squeezed(), tc, thw), lambda b, s, c: (b, c, s))
    o_spec = pl.BlockSpec((pl.Squeezed(), tc, thw), lambda b, s, c: (b, c, s))
    n_spec = pl.BlockSpec((pl.Squeezed(), 1, thw), lambda b, s, c: (b, 0, s))
    w_spec = pl.BlockSpec((tc, 1), lambda b, s, c: (c, 0))

    # Explicit VMEM budget derived from the chosen tiles so the block_bytes
    # knob is portable across scoped-VMEM defaults (16 MiB v5e, 32 MiB v6e/v7x).
    n_bytes = jnp.dtype(n_flat.dtype).itemsize
    w_bytes = jnp.dtype(w_2d.dtype).itemsize
    live = (2 * 2 * tc * thw * dtype_bytes      # double-buffered x + out tiles
            + 2 * thw * n_bytes                 # double-buffered noise tile
            + 2 * tc * w_bytes)                 # double-buffered weight tile
    vmem_limit = int(live + (4 << 20))          # generous slack for scratch

    out_flat = pl.pallas_call(
        _noise_add_kernel,
        out_shape=jax.ShapeDtypeStruct((N, C, HW), dtype),
        grid_spec=pltpu.PrefetchScalarGridSpec(
            num_scalar_prefetch=0,
            grid=grid,
            in_specs=[w_spec, x_spec, n_spec],
            out_specs=o_spec,
        ),
        compiler_params=pltpu.CompilerParams(
            dimension_semantics=("parallel", "parallel", "parallel"),
            vmem_limit_bytes=vmem_limit,
        ),
    )(w_2d, x_flat, n_flat)

    return out_flat.reshape(N, C, H, W)


if __name__ == "__main__":
    key = jax.random.PRNGKey(0)
    k_x, k_w, k_n, k_x2, k_n2, k_x3 = jax.random.split(key, 6)

    # --- Test 1: explicit noise, f32, spatial a multiple of 128 ------------
    N, C, H, W = 2, 4, 16, 16
    x = jax.random.normal(k_x, (N, C, H, W), dtype=jnp.float32)
    # Module __init__ uses zeros(channels); use nonzero deterministic weights
    # so the kernel does real work.
    weight = jax.random.normal(k_w, (C,), dtype=jnp.float32)
    noise = jax.random.normal(k_n, (N, 1, H, W), dtype=jnp.float32)

    out = jax.block_until_ready(noise_layer(x, weight, noise))
    ref = x + weight.reshape(1, C, 1, 1) * noise
    assert out.shape == (N, C, H, W)
    assert out.dtype == x.dtype
    assert jnp.allclose(out, ref, atol=1e-6, rtol=1e-6)

    # --- Test 2: noise generated by the wrapper (noise=None) ---------------
    out2 = jax.block_until_ready(noise_layer(x, weight, None, seed=123))
    assert out2.shape == (N, C, H, W)
    assert bool(jnp.all(jnp.isfinite(out2)))
    # Semantic contract: the added noise is per-pixel, constant over channels:
    # (out2 - x)[:, c] * w[0] == (out2 - x)[:, 0] * w[c].
    delta = out2 - x
    lhs = delta * weight[0]
    rhs = delta[:, :1] * weight.reshape(1, C, 1, 1)
    assert jnp.allclose(lhs, rhs, atol=1e-3, rtol=1e-3)
    # Deterministic for a fixed seed.
    out2b = jax.block_until_ready(noise_layer(x, weight, None, seed=123))
    assert jnp.allclose(out2, out2b)

    # --- Test 3: spatial extent NOT a multiple of 128 (edge masking) -------
    N3, C3, H3, W3 = 1, 3, 13, 17   # H*W = 221
    x3 = jax.random.normal(k_x2, (N3, C3, H3, W3), dtype=jnp.float32)
    w3 = jax.random.normal(k_w, (C3,), dtype=jnp.float32)
    n3 = jax.random.normal(k_n2, (N3, 1, H3, W3), dtype=jnp.float32)
    out3 = jax.block_until_ready(noise_layer(x3, w3, n3))
    ref3 = x3 + w3.reshape(1, C3, 1, 1) * n3
    assert out3.shape == (N3, C3, H3, W3)
    assert jnp.allclose(out3, ref3, atol=1e-6, rtol=1e-6)

    # --- Test 4: bf16 activations with f32 weight/noise (in-kernel cast) ---
    xb = jax.random.normal(k_x3, (N, C, H, W), dtype=jnp.bfloat16)
    outb = jax.block_until_ready(noise_layer(xb, weight, noise))
    refb = xb + (weight.reshape(1, C, 1, 1).astype(jnp.bfloat16)
                 * noise.astype(jnp.bfloat16))
    assert outb.dtype == jnp.bfloat16
    assert jnp.allclose(outb.astype(jnp.float32), refb.astype(jnp.float32),
                        atol=1e-2, rtol=1e-2)

    print("KERNEL_OK")
</pallas_src>

<mosaic_0001>
module attributes {stable_mosaic.version = 11 : i64} {
  func.func @_noise_add_kernel(%arg0: i32, %arg1: i32, %arg2: i32, %arg3: memref<4x1xf32, #tpu.memory_space<vmem>>, %arg4: memref<1x4x256xf32, #tpu.memory_space<vmem>>, %arg5: memref<1x1x256xf32, #tpu.memory_space<vmem>>, %arg6: memref<1x4x256xf32, #tpu.memory_space<vmem>>) attributes {dimension_semantics = [#tpu.dimension_semantics<parallel>, #tpu.dimension_semantics<parallel>, #tpu.dimension_semantics<parallel>], iteration_bounds = array<i64: 2, 1, 1>, scalar_prefetch = 0 : i64, scratch_operands = 0 : i64, tpu.core_type = #tpu.core_type<tc>, window_params = [{transform_indices = @transform_0, window_bounds = array<i64: 4, 1>}, {transform_indices = @transform_1, window_bounds = array<i64: 1, 4, 256>}, {transform_indices = @transform_2, window_bounds = array<i64: 1, 1, 256>}, {transform_indices = @transform_3, window_bounds = array<i64: 1, 4, 256>}]} {
    %c0 = arith.constant 0 : index
    %c0_0 = arith.constant 0 : index
    %0 = vector.load %arg3[%c0, %c0_0] : memref<4x1xf32, #tpu.memory_space<vmem>>, vector<4x1xf32>
    %c0_1 = arith.constant 0 : index
    %c0_2 = arith.constant 0 : index
    %c0_3 = arith.constant 0 : index
    %1 = vector.load %arg5[%c0_1, %c0_2, %c0_3] : memref<1x1x256xf32, #tpu.memory_space<vmem>>, vector<1x1x256xf32>
    %2 = vector.shape_cast %1 : vector<1x1x256xf32> to vector<1x256xf32>
    %c0_4 = arith.constant 0 : index
    %c0_5 = arith.constant 0 : index
    %c0_6 = arith.constant 0 : index
    %3 = vector.load %arg4[%c0_4, %c0_5, %c0_6] : memref<1x4x256xf32, #tpu.memory_space<vmem>>, vector<1x4x256xf32>
    %4 = vector.shape_cast %3 : vector<1x4x256xf32> to vector<4x256xf32>
    %5 = vector.broadcast %0 : vector<4x1xf32> to vector<4x256xf32>
    %6 = vector.broadcast %2 : vector<1x256xf32> to vector<4x256xf32>
    %7 = arith.mulf %5, %6 : vector<4x256xf32>
    %8 = arith.addf %4, %7 : vector<4x256xf32>
    %c0_7 = arith.constant 0 : index
    %c0_8 = arith.constant 0 : index
    %c0_9 = arith.constant 0 : index
    %9 = vector.load %arg6[%c0_7, %c0_8, %c0_9] : memref<1x4x256xf32, #tpu.memory_space<vmem>>, vector<1x4x256xf32>
    %10 = vector.shape_cast %9 : vector<1x4x256xf32> to vector<4x256xf32>
    %11 = vector.shape_cast %8 : vector<4x256xf32> to vector<1x4x256xf32>
    tpu.vector_store %arg6[%c0_7, %c0_8, %c0_9], %11 {strides = array<i32>} : memref<1x4x256xf32, #tpu.memory_space<vmem>>, vector<1x4x256xf32>,
    return
  }
  func.func @transform_0(%arg0: i32, %arg1: i32, %arg2: i32) -> (i32, i32) {
    %c0_i32 = arith.constant 0 : i32
    %c0_i32_0 = arith.constant 0 : i32
    return %arg2, %c0_i32 : i32, i32
  }
  func.func @transform_1(%arg0: i32, %arg1: i32, %arg2: i32) -> (i32, i32, i32) {
    %c0_i32 = arith.constant 0 : i32
    return %arg0, %arg2, %arg1 : i32, i32, i32
  }
  func.func @transform_2(%arg0: i32, %arg1: i32, %arg2: i32) -> (i32, i32, i32) {
    %c0_i32 = arith.constant 0 : i32
    %c0_i32_0 = arith.constant 0 : i32
    return %arg0, %c0_i32, %arg1 : i32, i32, i32
  }
  func.func @transform_3(%arg0: i32, %arg1: i32, %arg2: i32) -> (i32, i32, i32) {
    %c0_i32 = arith.constant 0 : i32
    return %arg0, %arg2, %arg1 : i32, i32, i32
  }
}

</mosaic_0001>

<llo_original>
// kernel: tpu_custom_call.1
$region0: #{tpu_custom_call.1}
  #allocation0 [shape = 'u32[]', space=smem, size = 0x4, offset = 0x4, fixed_abs, tag = 'smem constant byte address 0x4 - core index']
  #allocation1 [shape = 'u32[72,128]{1,0:T(1,128)}', space=vmem, size = 0x9000, scoped, tag = 'internal scratch']
  %s0 = inlined_call_operand.vmem [shape: f32[4,1], index: 0, kind: input, shape index: {}]
  %s1 = inlined_call_operand.hbm [shape: f32[2,4,256], index: 1, kind: input, shape index: {}]
  %s2 = inlined_call_operand.vmem [shape: f32[2,1,256], index: 2, kind: input, shape index: {}]
  %s3 = inlined_call_operand.hbm [shape: f32[2,4,256], index: 3, kind: output, shape index: {}]
  %s4 = sld [smem:[#allocation0]]
  $region49: #{tpu_custom_call.1} parent=0
    _
  %s6 = ssub.s32 1, %s4
  %s7 = scalar_select 0, %s6, %s4
  $region1: #{tpu_custom_call.1} parent=0
    #allocation2 [shape = 'u8[8192]{0}', space=vmem, size = 0x2000, scoped, tag = 'input window, operand 1']
    #allocation3 [shape = 's32[2]{0}', space=sflag, size = 0x8, scoped, tag = 'scoped memory for tpu_custom_call.1']
    #allocation4 [shape = 's32[2]{0}', space=sflag, size = 0x8, scoped, tag = 'scoped memory for tpu_custom_call.1']
    #allocation5 [shape = 'u8[8192]{0}', space=vmem, size = 0x2000, scoped, tag = 'output window, operand 0']
    %8 = vsyncpa [#allocation3], 0
    %s9 = scalar_lea.sflag [#allocation3], 1
    %10 = vsyncpa %s9, 0
    %11 = vsyncpa [#allocation4], 0
    %s12 = scalar_lea.sflag [#allocation4], 1
    %13 = vsyncpa %s12, 0
    loop: start=0, step=1, limit=4
    $region2: #{tpu_custom_call.1} parent=1 // loop_pre_header
      _
    $region3: #{tpu_custom_call.1} parent=1 // loop_header
      %s15 = sphi 0, %s19
      %p16 = scmp.ge.s32.totalorder %s15, 4
      %s22 = sphi 0, %s41
      %s23 = sphi 0, %s37
      %s24 = sphi 0, %s33
      %s25 = sphi 0, %s22
      %s26 = sphi 0, %s23
      %s27 = sphi 0, %s24
      %s28 = sphi 0, %s25
      %s29 = sphi 0, %s26
      %s30 = sphi 0, %s27
      %s44 = sphi 0, %s46
      %s47 = sphi 0, %s44
      %s48 = sphi 0, %s47
      %s64 = sphi 0, %s48
      %s74 = sphi 0, %s76
      %s77 = sphi 0, %s74
      %s78 = sphi 0, %s77
      %s94 = sphi 0, %s78
      %s102 = sphi 0, %s104
      %s105 = sphi 0, %s102
      %s106 = sphi 0, %s105
      %s122 = sphi 0, %s106
      %s132 = sphi 0, %s134
      %s135 = sphi 0, %s132
      %s136 = sphi 0, %s135
      %s152 = sphi 0, %s136
    $region4: #{tpu_custom_call.1} parent=1 // loop_header_branch
      %18 = sbr.rel (%p16) target = $region8
    $region5: #{tpu_custom_call.1} parent=1 // loop_body
      %s20 = ssub.s32 %s15, 1
      %s21 = ssub.s32 %s15, 2
      %s31 = sadd.s32 1, %s24
      %p32 = scmp.ge.s32.totalorder %s31, 1
      %s33 = scalar_select %p32, 0, %s31
      %s34 = sadd.s32 1, %s23
      %s35 = scalar_select %p32, %s34, %s23
      %p36 = scmp.ge.s32.totalorder %s35, 1
      %s37 = scalar_select %p36, 0, %s35
      %s38 = sadd.s32 1, %s22
      %s39 = scalar_select %p36, %s38, %s22
      %p40 = scmp.ge.s32.totalorder %s39, 2
      %s41 = scalar_select %p40, 0, %s39
      %s42 = ssub.s32 %s24, %s33
      %p43 = scmp.eq.s32.totalorder %s42, 0
      %s45 = sadd.s32 %s44, 1
      %s46 = scalar_select %p43, %s44, %s45
      %p49 = pneg %p43
      %p50 = scmp.eq.s32.totalorder %s15, 1
      %p51 = por %p49, %p50
      %p52 = scmp.ne.s32.totalorder %s44, %s47
      %p53 = scmp.eq.s32.totalorder %s15, 0
      %p54 = por %p52, %p53
      %p55 = scmp.ne.s32.totalorder %s44, %s47
      %p56 = scmp.eq.s32.totalorder %s20, 1
      %p57 = por %p55, %p56
      %p58 = scmp.ne.s32.totalorder %s47, %s48
      %p59 = scmp.eq.s32.totalorder %s20, 0
      %p60 = por %p58, %p59
      %p61 = scmp.ne.s32.totalorder %s47, %s48
      %p62 = scmp.eq.s32.totalorder %s21, 1
      %p63 = por %p61, %p62
      %p65 = scmp.ne.s32.totalorder %s48, %s64
      %p66 = scmp.eq.s32.totalorder %s21, 0
      %p67 = por %p65, %p66
      %s68 = ssub.s32 %s22, %s41
      %s69 = ssub.s32 %s24, %s33
      %s70 = sor.u32 %s68, %s69
      %s71 = ssub.s32 %s23, %s37
      %s72 = sor.u32 %s70, %s71
      %p73 = scmp.eq.s32.totalorder %s72, 0
      %s75 = sadd.s32 %s74, 1
      %s76 = scalar_select %p73, %s74, %s75
      %p79 = pneg %p73
      %p80 = scmp.eq.s32.totalorder %s15, 1
      %p81 = por %p79, %p80
      %p82 = scmp.ne.s32.totalorder %s74, %s77
      %p83 = scmp.eq.s32.totalorder %s15, 0
      %p84 = por %p82, %p83
      %p85 = scmp.ne.s32.totalorder %s74, %s77
      %p86 = scmp.eq.s32.totalorder %s20, 1
      %p87 = por %p85, %p86
      %p88 = scmp.ne.s32.totalorder %s77, %s78
      %p89 = scmp.eq.s32.totalorder %s20, 0
      %p90 = por %p88, %p89
      %p91 = scmp.ne.s32.totalorder %s77, %s78
      %p92 = scmp.eq.s32.totalorder %s21, 1
      %p93 = por %p91, %p92
      %p95 = scmp.ne.s32.totalorder %s78, %s94
      %p96 = scmp.eq.s32.totalorder %s21, 0
      %p97 = por %p95, %p96
      %s98 = ssub.s32 %s22, %s41
      %s99 = ssub.s32 %s23, %s37
      %s100 = sor.u32 %s98, %s99
      %p101 = scmp.eq.s32.totalorder %s100, 0
      %s103 = sadd.s32 %s102, 1
      %s104 = scalar_select %p101, %s102, %s103
      %p107 = pneg %p101
      %p108 = scmp.eq.s32.totalorder %s15, 1
      %p109 = por %p107, %p108
      %p110 = scmp.ne.s32.totalorder %s102, %s105
      %p111 = scmp.eq.s32.totalorder %s15, 0
      %p112 = por %p110, %p111
      %p113 = scmp.ne.s32.totalorder %s102, %s105
      %p114 = scmp.eq.s32.totalorder %s20, 1
      %p115 = por %p113, %p114
      %p116 = scmp.ne.s32.totalorder %s105, %s106
      %p117 = scmp.eq.s32.totalorder %s20, 0
      %p118 = por %p116, %p117
      %p119 = scmp.ne.s32.totalorder %s105, %s106
      %p120 = scmp.eq.s32.totalorder %s21, 1
      %p121 = por %p119, %p120
      %p123 = scmp.ne.s32.totalorder %s106, %s122
      %p124 = scmp.eq.s32.totalorder %s21, 0
      %p125 = por %p123, %p124
      %s126 = ssub.s32 %s22, %s41
      %s127 = ssub.s32 %s24, %s33
      %s128 = sor.u32 %s126, %s127
      %s129 = ssub.s32 %s23, %s37
      %s130 = sor.u32 %s128, %s129
      %p131 = scmp.eq.s32.totalorder %s130, 0
      %s133 = sadd.s32 %s132, 1
      %s134 = scalar_select %p131, %s132, %s133
      %p137 = pneg %p131
      %p138 = scmp.eq.s32.totalorder %s15, 1
      %p139 = por %p137, %p138
      %p140 = scmp.ne.s32.totalorder %s132, %s135
      %p141 = scmp.eq.s32.totalorder %s15, 0
      %p142 = por %p140, %p141
      %p143 = scmp.ne.s32.totalorder %s132, %s135
      %p144 = scmp.eq.s32.totalorder %s20, 1
      %p145 = por %p143, %p144
      %p146 = scmp.ne.s32.totalorder %s135, %s136
      %p147 = scmp.eq.s32.totalorder %s20, 0
      %p148 = por %p146, %p147
      %p149 = scmp.ne.s32.totalorder %s135, %s136
      %p150 = scmp.eq.s32.totalorder %s21, 1
      %p151 = por %p149, %p150
      %p153 = scmp.ne.s32.totalorder %s136, %s152
      %p154 = scmp.eq.s32.totalorder %s21, 0
      %p155 = por %p153, %p154
      %p156 = scmp.le.s32.totalorder 1, %s15
      %p157 = scmp.lt.s32.totalorder %s15, 3
      %p158 = pnand %p156, %p157
      %p159 = pneg %p158
      // Predicated region
      $region9: #{tpu_custom_call.1} parent=5 // pred_check
        _
      $region10: #{tpu_custom_call.1} parent=5 // pred_check_branch
        %161 = sbr.rel (%p158) target = $region12
      $region11: #{tpu_custom_call.1} parent=5 // pred_region
        %s162 = ssub.s32 %s15, 1
        // Predicated region
        $region13: #{tpu_custom_call.1} parent=11 // pred_check
          %p163 = pneg %p60
        $region14: #{tpu_custom_call.1} parent=11 // pred_check_branch
          %165 = sbr.rel (%p163) target = $region16
        $region15: #{tpu_custom_call.1} parent=11 // pred_region
          %p166 = scmp.lt.s32.totalorder %s27, 0
          %s167 = scalar_select %p166, %s27, 0
          %s168 = smul.addr %s167, 4
          %s169 = scalar_lea.vmem %s0, %s168
        $region16: #{tpu_custom_call.1} parent=11 // pred_fallthru
          _
      $region12: #{tpu_custom_call.1} parent=5 // pred_fallthru
        _
      %p170 = scmp.lt.s32.totalorder %s15, 2
      // Predicated region
      $region17: #{tpu_custom_call.1} parent=5 // pred_check
        %p171 = pneg %p170
      $region18: #{tpu_custom_call.1} parent=5 // pred_check_branch
        %173 = sbr.rel (%p171) target = $region20
      $region19: #{tpu_custom_call.1} parent=5 // pred_region
        // Predicated region
        $region21: #{tpu_custom_call.1} parent=19 // pred_check
          %p174 = pneg %p84
        $region22: #{tpu_custom_call.1} parent=19 // pred_check_branch
          %176 = sbr.rel (%p174) target = $region24
        $region23: #{tpu_custom_call.1} parent=19 // pred_region
          %s177 = sand.u32 %s74, 1
          %s178 = scalar_lea.sflag [#allocation3], %s177
          %s179 = sand.u32 %s74, 1
          %s180 = smul.addr %s179, 8
          %s181 = scalar_lea.vmem [#allocation2], %s180
          %s182 = smul.u32 2, %s23
          %184 = vsyncadd %s178, 0
          %s185 = smul.addr %s24, 2
          %s186 = sadd.s32 %s182, %s185
          %s187 = smul.addr %s22, 2
          %s188 = sadd.s32 %s186, %s187
          %s189 = smul.addr %s188, 4
          %s190 = scalar_lea.hbm %s1, %s189
          %s192 = sshll.u32 %s190, 4
          %s193 = int_to_ptr.hbm [resolvable:$true] %s192
          %s194 = sshll.u32 %s181, 4
          %s195 = int_to_ptr.vmem [resolvable:$true] %s194
          %197 = dma.hbm_to_vmem [thread:$0]  %s193, 128, %s195, %s178
        $region24: #{tpu_custom_call.1} parent=19 // pred_fallthru
          _
        // Predicated region
        $region25: #{tpu_custom_call.1} parent=19 // pred_check
          %p198 = pneg %p112
        $region26: #{tpu_custom_call.1} parent=19 // pred_check_branch
          %200 = sbr.rel (%p198) target = $region28
        $region27: #{tpu_custom_call.1} parent=19 // pred_region
          %s201 = smul.u32 2, %s23
          %p202 = scmp.lt.s32.totalorder %s22, 1
          %s203 = scalar_select %p202, %s22, 1
          %p204 = scmp.lt.s32.totalorder %s201, 1
          %s205 = scalar_select %p204, %s201, 1
          %s206 = smul.addr %s203, 2
          %s207 = sadd.s32 %s205, %s206
          %s208 = scalar_lea.vmem %s2, %s207
          %s209 = smul.u32 2, %s23
        $region28: #{tpu_custom_call.1} parent=19 // pred_fallthru
          _
      $region20: #{tpu_custom_call.1} parent=5 // pred_fallthru
        _
      %p210 = scmp.le.s32.totalorder 1, %s15
      %p211 = scmp.lt.s32.totalorder %s15, 3
      %p212 = pnand %p210, %p211
      %p213 = pneg %p212
      // Predicated region
      $region29: #{tpu_custom_call.1} parent=5 // pred_check
        _
      $region30: #{tpu_custom_call.1} parent=5 // pred_check_branch
        %215 = sbr.rel (%p212) target = $region32
      $region31: #{tpu_custom_call.1} parent=5 // pred_region
        %s216 = ssub.s32 %s15, 1
        %s217 = sand.u32 %s77, 1
        %s218 = scalar_lea.sflag [#allocation3], %s217
        %s219 = sand.u32 %s77, 1
        %s220 = smul.addr %s219, 8
        %s221 = scalar_lea.vmem [#allocation2], %s220
        // Predicated region
        $region33: #{tpu_custom_call.1} parent=31 // pred_check
          %p222 = pneg %p90
        $region34: #{tpu_custom_call.1} parent=31 // pred_check_branch
          %224 = sbr.rel (%p222) target = $region36
        $region35: #{tpu_custom_call.1} parent=31 // pred_region
          %226 = dma.done %s218, 128
        $region36: #{tpu_custom_call.1} parent=31 // pred_fallthru
          _
        %p227 = scmp.lt.s32.totalorder %s27, 0
        %s228 = scalar_select %p227, %s27, 0
        %s229 = smul.addr %s228, 4
        %s230 = scalar_lea.vmem %s0, %s229
        %p231 = pneg %p60
        %p232 = pneg %p57
        %s233 = sand.u32 %s77, 1
        %s234 = scalar_lea.sflag [#allocation3], %s233
        %s235 = sand.u32 %s77, 1
        %s236 = smul.addr %s235, 8
        %s237 = scalar_lea.vmem [#allocation2], %s236
        %p238 = pneg %p90
        %p239 = pneg %p87
        %s240 = smul.u32 2, %s26
        %p241 = scmp.lt.s32.totalorder %s25, 1
        %s242 = scalar_select %p241, %s25, 1
        %p243 = scmp.lt.s32.totalorder %s240, 1
        %s244 = scalar_select %p243, %s240, 1
        %s245 = smul.addr %s242, 2
        %s246 = sadd.s32 %s244, %s245
        %s247 = scalar_lea.vmem %s2, %s246
        %p248 = pneg %p118
        %p249 = pneg %p115
        %p250 = pneg %p148
        %p251 = pneg %p145
        %s252 = sand.u32 %s135, 1
        %s253 = scalar_lea.sflag [#allocation4], %s252
        %s254 = sand.u32 %s135, 1
        %s255 = smul.addr %s254, 8
        %s256 = scalar_lea.vmem [#allocation5], %s255
        %p257 = scmp.lt.s32.totalorder %s27, 0
        %s258 = scalar_select %p257, %s27, 0
        %s259 = smul.addr %s258, 4
        %s260 = scalar_lea.vmem %s0, %s259
        %s261 = smul.u32 2, %s26
        %s262 = smul.u32 2, %s26
        %p263 = scmp.lt.s32.totalorder %s25, 1
        %s264 = scalar_select %p263, %s25, 1
        %p265 = scmp.lt.s32.totalorder %s262, 1
        %s266 = scalar_select %p265, %s262, 1
        %s267 = smul.addr %s264, 2
        %s268 = sadd.s32 %s266, %s267
        %s269 = scalar_lea.vmem %s2, %s268
        %s270 = smul.u32 2, %s26
        %s271 = smul.u32 2, %s26
        %v272 = vld [vmem:[%s260] sm:$0xf]
        %v273 = vld [vmem:[%s269] sm:$0x3]
        %v274 = vld [vmem:[%s221] sm:$0xff]
        %276 = vset.pattern.permute.xlu0 0
        %277 = vperm.xlu0 %276, %v272
        %v278 = vpop.permute.xlu0 %277
        %v281 = vperm.slane %v273, 0
        %v282 = vperm.slane %v273, 1
        %v285 = vmul.f32 %v278, %v281
        %v286 = vmul.f32 %v278, %v282
        %v289 = vrot.slane %v286, 4
        %vm290 = vcmask 1043456
        %v291 = vsel %vm290, %v285, %v289
        %v293 = vadd.f32 %v274, %v291
        %294 = vst [vmem:[%s256] sm:$0xff] %v293
        %s295 = sand.u32 %s135, 1
        %s296 = scalar_lea.sflag [#allocation4], %s295
        %s297 = sand.u32 %s135, 1
        %s298 = smul.addr %s297, 8
        %s299 = scalar_lea.vmem [#allocation5], %s298
        // Predicated region
        $region37: #{tpu_custom_call.1} parent=31 // pred_check
          %p300 = pneg %p145
        $region38: #{tpu_custom_call.1} parent=31 // pred_check_branch
          %302 = sbr.rel (%p300) target = $region40
        $region39: #{tpu_custom_call.1} parent=31 // pred_region
          %s303 = smul.u32 2, %s26
          %305 = vsyncadd %s296, 0
          %s306 = smul.addr %s27, 2
          %s307 = sadd.s32 %s303, %s306
          %s308 = smul.addr %s25, 2
          %s309 = sadd.s32 %s307, %s308
          %s310 = smul.addr %s309, 4
          %s311 = scalar_lea.hbm %s3, %s310
          %s313 = sshll.u32 %s299, 4
          %s314 = int_to_ptr.vmem [resolvable:$true] %s313
          %s315 = sshll.u32 %s311, 4
          %s316 = int_to_ptr.hbm [resolvable:$true] %s315
          %318 = dma.vmem_to_hbm [thread:$0]  %s314, 128, %s316, %s296
        $region40: #{tpu_custom_call.1} parent=31 // pred_fallthru
          _
      $region32: #{tpu_custom_call.1} parent=5 // pred_fallthru
        _
      %p319 = scmp.le.s32.totalorder 2, %s15
      // Predicated region
      $region41: #{tpu_custom_call.1} parent=5 // pred_check
        %p320 = pneg %p319
      $region42: #{tpu_custom_call.1} parent=5 // pred_check_branch
        %322 = sbr.rel (%p320) target = $region44
      $region43: #{tpu_custom_call.1} parent=5 // pred_region
        %s323 = ssub.s32 %s15, 2
        // Predicated region
        $region45: #{tpu_custom_call.1} parent=43 // pred_check
          %p324 = pneg %p151
        $region46: #{tpu_custom_call.1} parent=43 // pred_check_branch
          %326 = sbr.rel (%p324) target = $region48
        $region47: #{tpu_custom_call.1} parent=43 // pred_region
          %s327 = sand.u32 %s136, 1
          %s328 = scalar_lea.sflag [#allocation4], %s327
          %s329 = sand.u32 %s136, 1
          %s330 = smul.addr %s329, 8
          %s331 = scalar_lea.vmem [#allocation5], %s330
          %333 = dma.done %s328, 128
        $region48: #{tpu_custom_call.1} parent=43 // pred_fallthru
          _
      $region44: #{tpu_custom_call.1} parent=5 // pred_fallthru
        _
    $region6: #{tpu_custom_call.1} parent=1 // loop_footer
      %s19 = sadd.s32 1, %s15
    $region7: #{tpu_custom_call.1} parent=1 // loop_footer_branch
      %14 = sbr.rel target = $region3
    $region8: #{tpu_custom_call.1} parent=1 // loop_exit
      _
    %334 = vsyncpa [#allocation3], 1
    %s335 = scalar_lea.sflag [#allocation3], 1
    %336 = vsyncpa %s335, 1
    %337 = vsyncpa [#allocation4], 1
    %s338 = scalar_lea.sflag [#allocation4], 1
    %339 = vsyncpa %s338, 1

</llo_original>
